<compile_context>
chip_gen: v7x
topology: tpu7x:2x2x1
jax: 0.10.0
libtpu: 0.0.40
codegen_flags: <defaults>
</compile_context>

<pallas_src>
import functools
import math

import jax
import jax.numpy as jnp
from jax import lax
from jax.experimental import pallas as pl
from jax.experimental.pallas import tpu as pltpu


def _round_up(x, m):
    return ((x + m - 1) // m) * m


def _lcm(a, b):
    return a * b // math.gcd(a, b)


def _has_bf16_vpu():
    """True on TPU generations with a bf16 VPU (v6e, v7x); False on v5e/older/unknown."""
    try:
        kind = jax.devices()[0].device_kind.lower()
    except Exception:
        return False
    if any(s in kind for s in ("v2", "v3", "v4", "v5")):
        return False
    return any(s in kind for s in ("v6", "v7", "7x"))


def _vmem_capacity_bytes():
    try:
        return int(pltpu.get_tpu_info().vmem_capacity_bytes)
    except Exception:
        return 128 * 1024 * 1024


# ----------------------------- Pallas kernel -------------------------------
def _tcs_kernel(x_body_ref, x_halo_ref, wdw_ref, wpw_ref, shift_ref, o_ref, xw_ref,
                *, kernel_size, stride, dilation, mult, ch, relu):
    # x_body_ref: (1, stride, TT_out, C_in_p)        bf16  phase-major body rows
    # x_halo_ref: (1, stride, HR_ph, C_in_p)         bf16  phase-major halo rows
    # wdw_ref:    (mult, K, C_in_p)                  fir dtype, depthwise taps (group-major)
    # wpw_ref:    (mult*C_in_p, C_out_p)             bf16  BN-scaled pointwise weights
    # shift_ref:  (1, C_out_p)                       f32   folded biases + BN shift
    # o_ref:      (1, TT_out, C_out_p)               bf16
    # xw_ref:     (stride, TT_out + HR_ph, C_in_p)   fir dtype VMEM scratch (stitched window)
    tt_out = o_ref.shape[1]
    fdt = xw_ref.dtype
    n_chunks = tt_out // ch

    # Stitch body + halo into one contiguous phase-major window.  Contiguous copies
    # only: the stride de-interleave is done once in the wrapper, not per tap.
    xw_ref[:, :tt_out, :] = x_body_ref[0].astype(fdt)
    xw_ref[:, tt_out:, :] = x_halo_ref[0].astype(fdt)

    shift = shift_ref[...]            # (1, C_out_p) f32
    wpw = wpw_ref[...]                # (mult*C_in_p, C_out_p) bf16, streamed by the MXU

    def chunk(c0):
        def tap(k):
            kd = k * dilation
            return xw_ref[kd % stride, pl.ds(c0 + kd // stride, ch), :]

        fir_parts = []
        for r in range(mult):                       # groups=C_in -> mult sub-filters
            acc = None                              # f32, promoted every 8 taps
            for k0 in range(0, kernel_size, 8):
                part = None                         # fir-dtype partial sum (bf16 on v6e/v7x)
                for k in range(k0, min(k0 + 8, kernel_size)):
                    term = tap(k) * wdw_ref[r, k:k + 1, :]
                    part = term if part is None else part + term
                part = part.astype(jnp.float32)
                acc = part if acc is None else acc + part
            fir_parts.append(acc.astype(jnp.bfloat16))
        # Stack groups along lanes -> single MXU contraction over mult*C_in_p.
        fir = fir_parts[0] if mult == 1 else jnp.concatenate(fir_parts, axis=-1)

        y = jnp.dot(fir, wpw, preferred_element_type=jnp.float32)
        y = y + shift
        if relu:
            y = jnp.maximum(y, 0.0)
        o_ref[0, pl.ds(c0, ch), :] = y.astype(o_ref.dtype)

    if n_chunks == 1:
        chunk(0)                                    # fully static offsets
    else:
        def body(c, carry):
            chunk(pl.multiple_of(c * ch, ch))
            return carry
        lax.fori_loop(0, n_chunks, body, 0)


# ------------------------------- wrappers ------------------------------------
def tcs_conv_ntc(x_ntc, params, *, kernel_size, padding, stride=1, dilation=1,
                 relu=True, eps=1e-5, time_tile=512, chunk_rows=128, fir_in_bf16=None):
    """Channels-last entry point: x_ntc (N, T, C_in) -> (N, T_out, C_out) bf16."""
    w_dw = params["w_dw"]          # (C_out, 1, K)
    b_dw = params["b_dw"]          # (C_out,)
    w_pw = params["w_pw"]          # (C_out, C_out, 1)
    b_pw = params["b_pw"]          # (C_out,)
    gamma, beta = params["gamma"], params["beta"]
    mean, var = params["running_mean"], params["running_var"]

    n, t, c_in = x_ntc.shape
    c_out = w_dw.shape[0]
    assert c_out % c_in == 0, "groups=C_in requires C_out to be a multiple of C_in"
    mult = c_out // c_in

    d_eff = dilation * (kernel_size - 1) + 1
    t_out = (t + 2 * padding - d_eff) // stride + 1
    assert t_out > 0

    # Lane-dense channel padding: output last dim multiple of 128 -> unmasked stores,
    # input last dim multiple of 128 -> dense vreg rows / full MXU lanes.
    c_in_p = max(128, _round_up(c_in, 128))
    c_out_p = max(128, _round_up(c_out, 128))

    if fir_in_bf16 is None:
        fir_in_bf16 = _has_bf16_vpu()
    fir_dtype = jnp.bfloat16 if fir_in_bf16 else jnp.float32
    fir_bytes = 2 if fir_in_bf16 else 4

    # --- time tiling: output tile TT_out (grid) chunked into `ch`-row pieces in-kernel.
    #     The halo (next (K-1)*dil rows) comes through a second, block-aligned BlockSpec.
    halo = max((kernel_size - 1) * dilation, 1)
    halo_r = _round_up(halo, 8 * stride)        # per-phase halo is a multiple of 8 sublanes
    hr_ph = halo_r // stride
    tt_align = _lcm(8, hr_ph)                   # keeps the halo block index integral
    t_out_al = _round_up(t_out, tt_align)
    ch = min(_round_up(chunk_rows, _lcm(tt_align, 16)), t_out_al)
    tt_out = min(_round_up(time_tile, ch), _round_up(t_out, ch))

    # --- generation-aware VMEM budget (v7x: 64 MiB/TC; v5e/v6e: 128 MiB) ----
    vmem_cap = _vmem_capacity_bytes()
    ws_target = (22 if vmem_cap <= 64 * 1024 * 1024 else 48) * 1024 * 1024

    def _vmem_est(tto):
        chh = min(ch, tto)
        b_in = 2 * stride * (tto + hr_ph) * c_in_p * 2          # bf16 body+halo, 2x buffered
        b_out = 2 * tto * c_out_p * 2                           # bf16 out, 2x buffered
        b_w = 2 * (mult * kernel_size * c_in_p * fir_bytes
                   + mult * c_in_p * c_out_p * 2 + c_out_p * 4)
        b_scr = stride * (tto + hr_ph) * c_in_p * fir_bytes     # stitched window scratch
        b_live = chh * (mult * c_in_p * (4 + 2) + c_out_p * 4)  # acc/fir/y live intermediates
        return b_in + b_out + b_w + b_scr + b_live

    while tt_out > ch and _vmem_est(tt_out) > ws_target:
        tt_out = max(ch, ((tt_out // 2) // ch) * ch)
    vmem_limit = min(max(ws_target + 8 * 1024 * 1024,
                         _vmem_est(tt_out) + 8 * 1024 * 1024),
                     vmem_cap - 8 * 1024 * 1024)

    assert tt_out % ch == 0 and tt_out % hr_ph == 0
    num_t = -(-t_out // tt_out)
    tt_body = tt_out * stride
    t_in_total = num_t * tt_body + halo_r
    pad_right = t_in_total - t - padding
    assert pad_right >= 0, (pad_right, t_in_total, t, padding)

    # Pad time (conv padding + tile/halo tail) and channels, cast to bf16, then
    # de-interleave into phase-major layout: x_d[b, p, j, c] = x_pad[b, j*stride + p, c].
    # For stride == 1 this reshape/transpose is free.
    x_pad = jnp.pad(x_ntc.astype(jnp.bfloat16),
                    ((0, 0), (padding, pad_right), (0, c_in_p - c_in)))
    t_ph = t_in_total // stride
    x_d = x_pad.reshape(n, t_ph, stride, c_in_p).transpose(0, 2, 1, 3)

    # --- fold BN + biases into the pointwise weights / one per-channel shift ---
    f32 = jnp.float32
    scale = gamma.astype(f32) / jnp.sqrt(var.astype(f32) + eps)                 # (C_out,)
    wdw = w_dw[:, 0, :].astype(f32)                                             # (C_out, K)
    wpw_scaled = w_pw[:, :, 0].T.astype(f32) * scale[None, :]                   # [j, o]
    shift = (beta.astype(f32) + (b_pw.astype(f32) - mean.astype(f32)) * scale
             + b_dw.astype(f32) @ wpw_scaled)                                   # (C_out,)

    # group-major re-layout: depthwise out channel j = c*mult + r reads in channel c
    wdw_g = wdw.reshape(c_in, mult, kernel_size).transpose(1, 2, 0)             # (mult, K, C_in)
    wdw_g = jnp.pad(wdw_g, ((0, 0), (0, 0), (0, c_in_p - c_in))).astype(fir_dtype)
    wpw_g = wpw_scaled.reshape(c_in, mult, c_out).transpose(1, 0, 2)            # (mult, C_in, C_out)
    wpw_g = jnp.pad(wpw_g, ((0, 0), (0, c_in_p - c_in), (0, c_out_p - c_out)))
    wpw_flat = wpw_g.reshape(mult * c_in_p, c_out_p).astype(jnp.bfloat16)
    shift_2d = jnp.pad(shift, (0, c_out_p - c_out)).reshape(1, c_out_p)

    kernel = functools.partial(
        _tcs_kernel, kernel_size=kernel_size, stride=stride, dilation=dilation,
        mult=mult, ch=ch, relu=relu)

    body_blocks = tt_out // hr_ph      # halo block index step (integer by construction)

    out = pl.pallas_call(
        kernel,
        out_shape=jax.ShapeDtypeStruct((n, t_out, c_out_p), jnp.bfloat16),
        grid_spec=pltpu.PrefetchScalarGridSpec(
            num_scalar_prefetch=0,
            grid=(n, num_t),
            in_specs=[
                pl.BlockSpec((1, stride, tt_out, c_in_p),
                             lambda b, ti: (b, 0, ti, 0)),
                pl.BlockSpec((1, stride, hr_ph, c_in_p),
                             lambda b, ti: (b, 0, (ti + 1) * body_blocks, 0)),
                pl.BlockSpec((mult, kernel_size, c_in_p), lambda b, ti: (0, 0, 0)),
                pl.BlockSpec((mult * c_in_p, c_out_p), lambda b, ti: (0, 0)),
                pl.BlockSpec((1, c_out_p), lambda b, ti: (0, 0)),
            ],
            out_specs=pl.BlockSpec((1, tt_out, c_out_p), lambda b, ti: (b, ti, 0)),
            scratch_shapes=[pltpu.VMEM((stride, tt_out + hr_ph, c_in_p), fir_dtype)],
        ),
        compiler_params=pltpu.CompilerParams(
            dimension_semantics=("parallel", "parallel"),
            vmem_limit_bytes=int(vmem_limit)),
    )(x_d, x_d, wdw_g, wpw_flat, shift_2d)

    return out[:, :, :c_out]


def tcs_conv(x, params, **kw):
    """PyTorch-compatible NCT interface: x (N, C_in, T) -> (N, C_out, T_out) bf16.
    (For stacked blocks prefer tcs_conv_ntc to avoid the transpose passes.)"""
    out_ntc = tcs_conv_ntc(jnp.transpose(x, (0, 2, 1)), params, **kw)
    return jnp.transpose(out_ntc, (0, 2, 1))


# --------------------------- pure-JAX reference ------------------------------
def tcs_conv_ref(x, params, *, kernel_size, padding, stride=1, dilation=1,
                 relu=True, eps=1e-5):
    c_in = x.shape[1]
    y = lax.conv_general_dilated(
        x, params["w_dw"], window_strides=(stride,), padding=[(padding, padding)],
        rhs_dilation=(dilation,), dimension_numbers=("NCH", "OIH", "NCH"),
        feature_group_count=c_in)
    y = y + params["b_dw"][None, :, None]
    y = lax.conv_general_dilated(
        y, params["w_pw"], window_strides=(1,), padding=[(0, 0)],
        dimension_numbers=("NCH", "OIH", "NCH"))
    y = y + params["b_pw"][None, :, None]
    y = (y - params["running_mean"][None, :, None]) / jnp.sqrt(
        params["running_var"] + eps)[None, :, None]
    y = y * params["gamma"][None, :, None] + params["beta"][None, :, None]
    if relu:
        y = jnp.maximum(y, 0.0)
    return y


# --------------------------------- demo --------------------------------------
def _make_params(key, c_in, c_out, k):
    ks = jax.random.split(key, 8)
    return {
        "w_dw": jax.random.normal(ks[0], (c_out, 1, k), jnp.float32) * 0.3,
        "b_dw": jax.random.normal(ks[1], (c_out,), jnp.float32) * 0.1,
        "w_pw": jax.random.normal(ks[2], (c_out, c_out, 1), jnp.float32) * 0.3,
        "b_pw": jax.random.normal(ks[3], (c_out,), jnp.float32) * 0.1,
        "gamma": 1.0 + 0.1 * jax.random.normal(ks[4], (c_out,), jnp.float32),
        "beta": 0.1 * jax.random.normal(ks[5], (c_out,), jnp.float32),
        "running_mean": 0.05 * jax.random.normal(ks[6], (c_out,), jnp.float32),
        "running_var": 1.0 + 0.2 * jax.random.uniform(ks[7], (c_out,), jnp.float32),
    }


if __name__ == "__main__":
    key = jax.random.PRNGKey(0)
    configs = [
        # (N, C_in, C_out, T, K, pad, stride, dil, relu)
        (2, 4, 4, 16, 3, 1, 1, 1, True),     # mult=1, plain
        (2, 4, 8, 16, 5, 4, 2, 2, False),    # mult=2, strided + dilated
    ]
    for i, (n, c_in, c_out, t, k, pad, stride, dil, relu) in enumerate(configs):
        kp, kx, key = jax.random.split(key, 3)
        params = _make_params(kp, c_in, c_out, k)
        x = jax.random.normal(kx, (n, c_in, t), jnp.float32)

        out = tcs_conv(x, params, kernel_size=k, padding=pad, stride=stride,
                       dilation=dil, relu=relu)
        out = jax.block_until_ready(out)

        ref = tcs_conv_ref(x, params, kernel_size=k, padding=pad, stride=stride,
                           dilation=dil, relu=relu)
        assert out.shape == ref.shape, (i, out.shape, ref.shape)
        err = float(jnp.max(jnp.abs(out.astype(jnp.float32) - ref)))
        # bf16 activations / weights across the MXU -> loosened tolerance
        assert jnp.allclose(out.astype(jnp.float32), ref, rtol=5e-2, atol=5e-2), (i, err)

    print("KERNEL_OK")
</pallas_src>

<mosaic_0001>
module attributes {stable_mosaic.version = 11 : i64} {
  func.func @_tcs_kernel(%arg0: i32, %arg1: i32, %arg2: memref<1x1x16x128xbf16, #tpu.memory_space<vmem>>, %arg3: memref<1x1x8x128xbf16, #tpu.memory_space<vmem>>, %arg4: memref<1x3x128xf32, #tpu.memory_space<vmem>>, %arg5: memref<128x128xbf16, #tpu.memory_space<vmem>>, %arg6: memref<1x128xf32, #tpu.memory_space<vmem>>, %arg7: memref<1x16x128xbf16, #tpu.memory_space<vmem>>, %arg8: memref<1x24x128xf32, #tpu.memory_space<vmem>>) attributes {dimension_semantics = [#tpu.dimension_semantics<parallel>, #tpu.dimension_semantics<parallel>], iteration_bounds = array<i64: 2, 1>, scalar_prefetch = 0 : i64, scratch_operands = 1 : i64, tpu.core_type = #tpu.core_type<tc>, window_params = [{transform_indices = @transform_0, window_bounds = array<i64: 1, 1, 16, 128>}, {transform_indices = @transform_1, window_bounds = array<i64: 1, 1, 8, 128>}, {pipeline_mode = #tpu.pipeline_mode<synchronous>, transform_indices = @transform_2, window_bounds = array<i64: 1, 3, 128>}, {pipeline_mode = #tpu.pipeline_mode<synchronous>, transform_indices = @transform_3, window_bounds = array<i64: 128, 128>}, {pipeline_mode = #tpu.pipeline_mode<synchronous>, transform_indices = @transform_4, window_bounds = array<i64: 1, 128>}, {transform_indices = @transform_5, window_bounds = array<i64: 1, 16, 128>}]} {
    %c0 = arith.constant 0 : index
    %c0_0 = arith.constant 0 : index
    %c0_1 = arith.constant 0 : index
    %c0_2 = arith.constant 0 : index
    %0 = vector.load %arg2[%c0, %c0_0, %c0_1, %c0_2] : memref<1x1x16x128xbf16, #tpu.memory_space<vmem>>, vector<1x1x16x128xbf16>
    %1 = vector.shape_cast %0 : vector<1x1x16x128xbf16> to vector<1x16x128xbf16>
    %2 = arith.extf %1 : vector<1x16x128xbf16> to vector<1x16x128xf32>
    %c0_3 = arith.constant 0 : index
    %c0_4 = arith.constant 0 : index
    %c0_5 = arith.constant 0 : index
    %3 = vector.load %arg8[%c0_3, %c0_4, %c0_5] : memref<1x24x128xf32, #tpu.memory_space<vmem>>, vector<1x16x128xf32>
    tpu.vector_store %arg8[%c0_3, %c0_4, %c0_5], %2 {strides = array<i32>} : memref<1x24x128xf32, #tpu.memory_space<vmem>>, vector<1x16x128xf32>,
    %c0_6 = arith.constant 0 : index
    %c0_7 = arith.constant 0 : index
    %c0_8 = arith.constant 0 : index
    %c0_9 = arith.constant 0 : index
    %4 = vector.load %arg3[%c0_6, %c0_7, %c0_8, %c0_9] : memref<1x1x8x128xbf16, #tpu.memory_space<vmem>>, vector<1x1x8x128xbf16>
    %5 = vector.shape_cast %4 : vector<1x1x8x128xbf16> to vector<1x8x128xbf16>
    %6 = arith.extf %5 : vector<1x8x128xbf16> to vector<1x8x128xf32>
    %c0_10 = arith.constant 0 : index
    %c16 = arith.constant 16 : index
    %c0_11 = arith.constant 0 : index
    %7 = vector.load %arg8[%c0_10, %c16, %c0_11] : memref<1x24x128xf32, #tpu.memory_space<vmem>>, vector<1x8x128xf32>
    tpu.vector_store %arg8[%c0_10, %c16, %c0_11], %6 {strides = array<i32>} : memref<1x24x128xf32, #tpu.memory_space<vmem>>, vector<1x8x128xf32>,
    %c0_12 = arith.constant 0 : index
    %c0_13 = arith.constant 0 : index
    %8 = vector.load %arg6[%c0_12, %c0_13] : memref<1x128xf32, #tpu.memory_space<vmem>>, vector<1x128xf32>
    %c0_14 = arith.constant 0 : index
    %c0_15 = arith.constant 0 : index
    %9 = vector.load %arg5[%c0_14, %c0_15] : memref<128x128xbf16, #tpu.memory_space<vmem>>, vector<128x128xbf16>
    %c0_16 = arith.constant 0 : index
    %c0_17 = arith.constant 0 : index
    %c0_18 = arith.constant 0 : index
    %10 = vector.load %arg8[%c0_16, %c0_17, %c0_18] : memref<1x24x128xf32, #tpu.memory_space<vmem>>, vector<1x16x128xf32>
    %11 = vector.shape_cast %10 : vector<1x16x128xf32> to vector<16x128xf32>
    %c0_19 = arith.constant 0 : index
    %c0_20 = arith.constant 0 : index
    %c0_21 = arith.constant 0 : index
    %12 = vector.load %arg4[%c0_19, %c0_20, %c0_21] : memref<1x3x128xf32, #tpu.memory_space<vmem>>, vector<1x1x128xf32>
    %13 = vector.shape_cast %12 : vector<1x1x128xf32> to vector<1x128xf32>
    %14 = vector.broadcast %13 : vector<1x128xf32> to vector<16x128xf32>
    %15 = arith.mulf %11, %14 : vector<16x128xf32>
    %c0_22 = arith.constant 0 : index
    %c1 = arith.constant 1 : index
    %c0_23 = arith.constant 0 : index
    %16 = vector.load %arg8[%c0_22, %c1, %c0_23] : memref<1x24x128xf32, #tpu.memory_space<vmem>>, vector<1x16x128xf32>
    %17 = vector.shape_cast %16 : vector<1x16x128xf32> to vector<16x128xf32>
    %c0_24 = arith.constant 0 : index
    %c1_25 = arith.constant 1 : index
    %c0_26 = arith.constant 0 : index
    %18 = vector.load %arg4[%c0_24, %c1_25, %c0_26] : memref<1x3x128xf32, #tpu.memory_space<vmem>>, vector<1x1x128xf32>
    %19 = vector.shape_cast %18 : vector<1x1x128xf32> to vector<1x128xf32>
    %20 = vector.broadcast %19 : vector<1x128xf32> to vector<16x128xf32>
    %21 = arith.mulf %17, %20 : vector<16x128xf32>
    %22 = arith.addf %15, %21 : vector<16x128xf32>
    %c0_27 = arith.constant 0 : index
    %c2 = arith.constant 2 : index
    %c0_28 = arith.constant 0 : index
    %23 = vector.load %arg8[%c0_27, %c2, %c0_28] : memref<1x24x128xf32, #tpu.memory_space<vmem>>, vector<1x16x128xf32>
    %24 = vector.shape_cast %23 : vector<1x16x128xf32> to vector<16x128xf32>
    %c0_29 = arith.constant 0 : index
    %c2_30 = arith.constant 2 : index
    %c0_31 = arith.constant 0 : index
    %25 = vector.load %arg4[%c0_29, %c2_30, %c0_31] : memref<1x3x128xf32, #tpu.memory_space<vmem>>, vector<1x1x128xf32>
    %26 = vector.shape_cast %25 : vector<1x1x128xf32> to vector<1x128xf32>
    %27 = vector.broadcast %26 : vector<1x128xf32> to vector<16x128xf32>
    %28 = arith.mulf %24, %27 : vector<16x128xf32>
    %29 = arith.addf %22, %28 : vector<16x128xf32>
    %30 = arith.truncf %29 : vector<16x128xf32> to vector<16x128xbf16>
    %cst = arith.constant dense<0.000000e+00> : vector<16x128xf32>
    %31 = tpu.matmul %30, %9, %cst {dimension_numbers = #tpu.dot_dimension_numbers<[1], [0], [0], [1], [0, 0, 1, 1], [], []>} : vector<16x128xbf16>, vector<128x128xbf16>, vector<16x128xf32> -> vector<16x128xf32>
    %32 = vector.broadcast %8 : vector<1x128xf32> to vector<16x128xf32>
    %33 = arith.addf %31, %32 : vector<16x128xf32>
    %cst_32 = arith.constant 0.000000e+00 : f32
    %34 = vector.broadcast %cst_32 : f32 to vector<16x128xf32>
    %35 = arith.maximumf %33, %34 : vector<16x128xf32>
    %36 = arith.truncf %35 : vector<16x128xf32> to vector<16x128xbf16>
    %c0_33 = arith.constant 0 : index
    %c0_34 = arith.constant 0 : index
    %c0_35 = arith.constant 0 : index
    %37 = vector.load %arg7[%c0_33, %c0_34, %c0_35] : memref<1x16x128xbf16, #tpu.memory_space<vmem>>, vector<1x16x128xbf16>
    %38 = vector.shape_cast %37 : vector<1x16x128xbf16> to vector<16x128xbf16>
    %39 = vector.shape_cast %36 : vector<16x128xbf16> to vector<1x16x128xbf16>
    tpu.vector_store %arg7[%c0_33, %c0_34, %c0_35], %39 {strides = array<i32>} : memref<1x16x128xbf16, #tpu.memory_space<vmem>>, vector<1x16x128xbf16>,
    return
  }
  func.func @transform_0(%arg0: i32, %arg1: i32) -> (i32, i32, i32, i32) {
    %c0_i32 = arith.constant 0 : i32
    %c0_i32_0 = arith.constant 0 : i32
    %c0_i32_1 = arith.constant 0 : i32
    return %arg0, %c0_i32, %arg1, %c0_i32_0 : i32, i32, i32, i32
  }
  func.func @transform_1(%arg0: i32, %arg1: i32) -> (i32, i32, i32, i32) {
    %c1_i32 = arith.constant 1 : i32
    %0 = arith.addi %arg1, %c1_i32 : i32
    %c2_i32 = arith.constant 2 : i32
    %1 = arith.muli %0, %c2_i32 : i32
    %c0_i32 = arith.constant 0 : i32
    %c0_i32_0 = arith.constant 0 : i32
    %c0_i32_1 = arith.constant 0 : i32
    return %arg0, %c0_i32, %1, %c0_i32_0 : i32, i32, i32, i32
  }
  func.func @transform_2(%arg0: i32, %arg1: i32) -> (i32, i32, i32) {
    %c0_i32 = arith.constant 0 : i32
    %c0_i32_0 = arith.constant 0 : i32
    %c0_i32_1 = arith.constant 0 : i32
    %c0_i32_2 = arith.constant 0 : i32
    return %c0_i32, %c0_i32_0, %c0_i32_1 : i32, i32, i32
  }
  func.func @transform_3(%arg0: i32, %arg1: i32) -> (i32, i32) {
    %c0_i32 = arith.constant 0 : i32
    %c0_i32_0 = arith.constant 0 : i32
    %c0_i32_1 = arith.constant 0 : i32
    return %c0_i32, %c0_i32_0 : i32, i32
  }
  func.func @transform_4(%arg0: i32, %arg1: i32) -> (i32, i32) {
    %c0_i32 = arith.constant 0 : i32
    %c0_i32_0 = arith.constant 0 : i32
    %c0_i32_1 = arith.constant 0 : i32
    return %c0_i32, %c0_i32_0 : i32, i32
  }
  func.func @transform_5(%arg0: i32, %arg1: i32) -> (i32, i32, i32) {
    %c0_i32 = arith.constant 0 : i32
    %c0_i32_0 = arith.constant 0 : i32
    return %arg0, %arg1, %c0_i32 : i32, i32, i32
  }
}

</mosaic_0001>

<llo_original>
// kernel: tpu_custom_call.1
$region0: #{tpu_custom_call.1}
  #allocation0 [shape = 'u32[]', space=smem, size = 0x4, offset = 0x4, fixed_abs, tag = 'smem constant byte address 0x4 - core index']
  #allocation1 [shape = 'u32[144,128]{1,0:T(1,128)}', space=vmem, size = 0x12000, scoped, tag = 'internal scratch']
  #allocation2 [shape = 'f32[1,24,128]{2,1,0:T(8,128)}', space=vmem, size = 0x3000, scoped, tag = 'scratch operand']
  %s0 = inlined_call_operand.hbm [shape: bf16[2,1,24,128], index: 0, kind: input, shape index: {}]
  %s1 = inlined_call_operand.hbm [shape: bf16[2,1,24,128], index: 1, kind: input, shape index: {}]
  %s2 = inlined_call_operand.vmem [shape: f32[1,3,128], index: 2, kind: input, shape index: {}]
  %s3 = inlined_call_operand.hbm [shape: bf16[128,128], index: 3, kind: input, shape index: {}]
  %s4 = inlined_call_operand.vmem [shape: f32[1,128], index: 4, kind: input, shape index: {}]
  %s5 = inlined_call_operand.hbm [shape: bf16[2,16,128], index: 5, kind: output, shape index: {}]
  %s6 = sld [smem:[#allocation0]]
  $region65: #{tpu_custom_call.1} parent=0
    _
  %s8 = ssub.s32 1, %s6
  %s9 = scalar_select 0, %s8, %s6
  $region1: #{tpu_custom_call.1} parent=0
    #allocation3 [shape = 'u8[8192]{0}', space=vmem, size = 0x2000, scoped, tag = 'input window, operand 0']
    #allocation4 [shape = 's32[2]{0}', space=sflag, size = 0x8, scoped, tag = 'scoped memory for tpu_custom_call.1']
    #allocation5 [shape = 's32[2]{0}', space=sflag, size = 0x8, scoped, tag = 'scoped memory for tpu_custom_call.1']
    #allocation6 [shape = 'u8[4096]{0}', space=vmem, size = 0x1000, scoped, tag = 'input window, operand 1']
    #allocation7 [shape = 's32[2]{0}', space=sflag, size = 0x8, scoped, tag = 'scoped memory for tpu_custom_call.1']
    #allocation8 [shape = 'u8[32768]{0}', space=vmem, size = 0x8000, scoped, tag = 'input window, operand 3, single buffered']
    #allocation9 [shape = 'u8[8192]{0}', space=vmem, size = 0x2000, scoped, tag = 'output window, operand 0']
    %10 = vsyncpa [#allocation4], 0
    %s11 = scalar_lea.sflag [#allocation4], 1
    %12 = vsyncpa %s11, 0
    %13 = vsyncpa [#allocation7], 0
    %s14 = scalar_lea.sflag [#allocation7], 1
    %15 = vsyncpa %s14, 0
    %16 = vsyncpa [#allocation5], 0
    %s17 = scalar_lea.sflag [#allocation5], 1
    %18 = vsyncpa %s17, 0
    loop: start=0, step=1, limit=4
    $region2: #{tpu_custom_call.1} parent=1 // loop_pre_header
      _
    $region3: #{tpu_custom_call.1} parent=1 // loop_header
      %s20 = sphi 0, %s24
      %p21 = scmp.ge.s32.totalorder %s20, 4
      %s27 = sphi 0, %s39
      %s28 = sphi 0, %s35
      %s29 = sphi 0, %s27
      %s30 = sphi 0, %s28
      %s31 = sphi 0, %s29
      %s32 = sphi 0, %s30
      %s44 = sphi 0, %s46
      %s47 = sphi 0, %s44
      %s48 = sphi 0, %s47
      %s64 = sphi 0, %s48
      %s76 = sphi 0, %s78
      %s79 = sphi 0, %s76
      %s80 = sphi 0, %s79
      %s96 = sphi 0, %s80
      %s100 = sphi 0, %s100
      %s102 = sphi 0, %s100
      %s103 = sphi 0, %s102
      %s117 = sphi 0, %s103
      %s121 = sphi 0, %s121
      %s123 = sphi 0, %s121
      %s124 = sphi 0, %s123
      %s138 = sphi 0, %s124
      %s142 = sphi 0, %s142
      %s144 = sphi 0, %s142
      %s145 = sphi 0, %s144
      %s159 = sphi 0, %s145
      %s167 = sphi 0, %s169
      %s170 = sphi 0, %s167
      %s171 = sphi 0, %s170
      %s187 = sphi 0, %s171
    $region4: #{tpu_custom_call.1} parent=1 // loop_header_branch
      %23 = sbr.rel (%p21) target = $region8
    $region5: #{tpu_custom_call.1} parent=1 // loop_body
      %s25 = ssub.s32 %s20, 1
      %s26 = ssub.s32 %s20, 2
      %s33 = sadd.s32 1, %s28
      %p34 = scmp.ge.s32.totalorder %s33, 1
      %s35 = scalar_select %p34, 0, %s33
      %s36 = sadd.s32 1, %s27
      %s37 = scalar_select %p34, %s36, %s27
      %p38 = scmp.ge.s32.totalorder %s37, 2
      %s39 = scalar_select %p38, 0, %s37
      %s40 = ssub.s32 %s27, %s39
      %s41 = ssub.s32 %s28, %s35
      %s42 = sor.u32 %s40, %s41
      %p43 = scmp.eq.s32.totalorder %s42, 0
      %s45 = sadd.s32 %s44, 1
      %s46 = scalar_select %p43, %s44, %s45
      %p49 = pneg %p43
      %p50 = scmp.eq.s32.totalorder %s20, 1
      %p51 = por %p49, %p50
      %p52 = scmp.ne.s32.totalorder %s44, %s47
      %p53 = scmp.eq.s32.totalorder %s20, 0
      %p54 = por %p52, %p53
      %p55 = scmp.ne.s32.totalorder %s44, %s47
      %p56 = scmp.eq.s32.totalorder %s25, 1
      %p57 = por %p55, %p56
      %p58 = scmp.ne.s32.totalorder %s47, %s48
      %p59 = scmp.eq.s32.totalorder %s25, 0
      %p60 = por %p58, %p59
      %p61 = scmp.ne.s32.totalorder %s47, %s48
      %p62 = scmp.eq.s32.totalorder %s26, 1
      %p63 = por %p61, %p62
      %p65 = scmp.ne.s32.totalorder %s48, %s64
      %p66 = scmp.eq.s32.totalorder %s26, 0
      %p67 = por %p65, %p66
      %s68 = sadd.s32 %s28, 1
      %s69 = smul.u32 %s68, 2
      %s70 = sadd.s32 %s35, 1
      %s71 = smul.u32 %s70, 2
      %s72 = ssub.s32 %s27, %s39
      %s73 = ssub.s32 %s69, %s71
      %s74 = sor.u32 %s72, %s73
      %p75 = scmp.eq.s32.totalorder %s74, 0
      %s77 = sadd.s32 %s76, 1
      %s78 = scalar_select %p75, %s76, %s77
      %p81 = pneg %p75
      %p82 = scmp.eq.s32.totalorder %s20, 1
      %p83 = por %p81, %p82
      %p84 = scmp.ne.s32.totalorder %s76, %s79
      %p85 = scmp.eq.s32.totalorder %s20, 0
      %p86 = por %p84, %p85
      %p87 = scmp.ne.s32.totalorder %s76, %s79
      %p88 = scmp.eq.s32.totalorder %s25, 1
      %p89 = por %p87, %p88
      %p90 = scmp.ne.s32.totalorder %s79, %s80
      %p91 = scmp.eq.s32.totalorder %s25, 0
      %p92 = por %p90, %p91
      %p93 = scmp.ne.s32.totalorder %s79, %s80
      %p94 = scmp.eq.s32.totalorder %s26, 1
      %p95 = por %p93, %p94
      %p97 = scmp.ne.s32.totalorder %s80, %s96
      %p98 = scmp.eq.s32.totalorder %s26, 0
      %p99 = por %p97, %p98
      %s101 = sadd.s32 %s100, 1
      %p104 = scmp.eq.s32.totalorder %s20, 1
      %p105 = scmp.ne.s32.totalorder %s100, %s102
      %p106 = scmp.eq.s32.totalorder %s20, 0
      %p107 = por %p105, %p106
      %p108 = scmp.ne.s32.totalorder %s100, %s102
      %p109 = scmp.eq.s32.totalorder %s25, 1
      %p110 = por %p108, %p109
      %p111 = scmp.ne.s32.totalorder %s102, %s103
      %p112 = scmp.eq.s32.totalorder %s25, 0
      %p113 = por %p111, %p112
      %p114 = scmp.ne.s32.totalorder %s102, %s103
      %p115 = scmp.eq.s32.totalorder %s26, 1
      %p116 = por %p114, %p115
      %p118 = scmp.ne.s32.totalorder %s103, %s117
      %p119 = scmp.eq.s32.totalorder %s26, 0
      %p120 = por %p118, %p119
      %s122 = sadd.s32 %s121, 1
      %p125 = scmp.eq.s32.totalorder %s20, 1
      %p126 = scmp.ne.s32.totalorder %s121, %s123
      %p127 = scmp.eq.s32.totalorder %s20, 0
      %p128 = por %p126, %p127
      %p129 = scmp.ne.s32.totalorder %s121, %s123
      %p130 = scmp.eq.s32.totalorder %s25, 1
      %p131 = por %p129, %p130
      %p132 = scmp.ne.s32.totalorder %s123, %s124
      %p133 = scmp.eq.s32.totalorder %s25, 0
      %p134 = por %p132, %p133
      %p135 = scmp.ne.s32.totalorder %s123, %s124
      %p136 = scmp.eq.s32.totalorder %s26, 1
      %p137 = por %p135, %p136
      %p139 = scmp.ne.s32.totalorder %s124, %s138
      %p140 = scmp.eq.s32.totalorder %s26, 0
      %p141 = por %p139, %p140
      %s143 = sadd.s32 %s142, 1
      %p146 = scmp.eq.s32.totalorder %s20, 1
      %p147 = scmp.ne.s32.totalorder %s142, %s144
      %p148 = scmp.eq.s32.totalorder %s20, 0
      %p149 = por %p147, %p148
      %p150 = scmp.ne.s32.totalorder %s142, %s144
      %p151 = scmp.eq.s32.totalorder %s25, 1
      %p152 = por %p150, %p151
      %p153 = scmp.ne.s32.totalorder %s144, %s145
      %p154 = scmp.eq.s32.totalorder %s25, 0
      %p155 = por %p153, %p154
      %p156 = scmp.ne.s32.totalorder %s144, %s145
      %p157 = scmp.eq.s32.totalorder %s26, 1
      %p158 = por %p156, %p157
      %p160 = scmp.ne.s32.totalorder %s145, %s159
      %p161 = scmp.eq.s32.totalorder %s26, 0
      %p162 = por %p160, %p161
      %s163 = ssub.s32 %s27, %s39
      %s164 = ssub.s32 %s28, %s35
      %s165 = sor.u32 %s163, %s164
      %p166 = scmp.eq.s32.totalorder %s165, 0
      %s168 = sadd.s32 %s167, 1
      %s169 = scalar_select %p166, %s167, %s168
      %p172 = pneg %p166
      %p173 = scmp.eq.s32.totalorder %s20, 1
      %p174 = por %p172, %p173
      %p175 = scmp.ne.s32.totalorder %s167, %s170
      %p176 = scmp.eq.s32.totalorder %s20, 0
      %p177 = por %p175, %p176
      %p178 = scmp.ne.s32.totalorder %s167, %s170
      %p179 = scmp.eq.s32.totalorder %s25, 1
      %p180 = por %p178, %p179
      %p181 = scmp.ne.s32.totalorder %s170, %s171
      %p182 = scmp.eq.s32.totalorder %s25, 0
      %p183 = por %p181, %p182
      %p184 = scmp.ne.s32.totalorder %s170, %s171
      %p185 = scmp.eq.s32.totalorder %s26, 1
      %p186 = por %p184, %p185
      %p188 = scmp.ne.s32.totalorder %s171, %s187
      %p189 = scmp.eq.s32.totalorder %s26, 0
      %p190 = por %p188, %p189
      %p191 = scmp.le.s32.totalorder 1, %s20
      %p192 = scmp.lt.s32.totalorder %s20, 3
      %p193 = pnand %p191, %p192
      %p194 = pneg %p193
      // Predicated region
      $region9: #{tpu_custom_call.1} parent=5 // pred_check
        _
      $region10: #{tpu_custom_call.1} parent=5 // pred_check_branch
        %196 = sbr.rel (%p193) target = $region12
      $region11: #{tpu_custom_call.1} parent=5 // pred_region
        %s197 = ssub.s32 %s20, 1
        // Predicated region
        $region13: #{tpu_custom_call.1} parent=11 // pred_check
          %p198 = pneg %p113
        $region14: #{tpu_custom_call.1} parent=11 // pred_check_branch
          %200 = sbr.rel (%p198) target = $region16
        $region15: #{tpu_custom_call.1} parent=11 // pred_region
          _
        $region16: #{tpu_custom_call.1} parent=11 // pred_fallthru
          _
        // Predicated region
        $region17: #{tpu_custom_call.1} parent=11 // pred_check
          %p201 = pneg %p134
        $region18: #{tpu_custom_call.1} parent=11 // pred_check_branch
          %203 = sbr.rel (%p201) target = $region20
        $region19: #{tpu_custom_call.1} parent=11 // pred_region
          %s205 = ssub.s32 1024, 1024
          %206 = vsyncadd [#allocation7], %s205
          %s207 = sshll.u32 [#allocation8], 4
          %s208 = int_to_ptr.vmem [resolvable:$true] %s207
          %213 = dma.hbm_to_vmem [thread:$0]  %s3, 1024, %s208, [#allocation7], 64, 64, 4
        $region20: #{tpu_custom_call.1} parent=11 // pred_fallthru
          _
        // Predicated region
        $region21: #{tpu_custom_call.1} parent=11 // pred_check
          %p214 = pneg %p155
        $region22: #{tpu_custom_call.1} parent=11 // pred_check_branch
          %216 = sbr.rel (%p214) target = $region24
        $region23: #{tpu_custom_call.1} parent=11 // pred_region
          _
        $region24: #{tpu_custom_call.1} parent=11 // pred_fallthru
          _
      $region12: #{tpu_custom_call.1} parent=5 // pred_fallthru
        _
      %p217 = scmp.lt.s32.totalorder %s20, 2
      // Predicated region
      $region25: #{tpu_custom_call.1} parent=5 // pred_check
        %p218 = pneg %p217
      $region26: #{tpu_custom_call.1} parent=5 // pred_check_branch
        %220 = sbr.rel (%p218) target = $region28
      $region27: #{tpu_custom_call.1} parent=5 // pred_region
        // Predicated region
        $region29: #{tpu_custom_call.1} parent=27 // pred_check
          %p221 = pneg %p54
        $region30: #{tpu_custom_call.1} parent=27 // pred_check_branch
          %223 = sbr.rel (%p221) target = $region32
        $region31: #{tpu_custom_call.1} parent=27 // pred_region
          %s224 = sand.u32 %s44, 1
          %s225 = scalar_lea.sflag [#allocation4], %s224
          %s226 = sand.u32 %s44, 1
          %s227 = smul.addr %s226, 8
          %s228 = scalar_lea.vmem [#allocation3], %s227
          %s229 = smul.u32 2, %s28
          %s230 = ssub.s32 3, %s229
          %p231 = scmp.lt.s32.totalorder %s230, 2
          %s232 = scalar_select %p231, %s230, 2
          %s233 = smul.u32 64, %s232
          %s235 = ssub.s32 128, %s233
          %236 = vsyncadd %s225, %s235
          %p237 = scmp.ne.s32.totalorder 0, %s233
          %s238 = smul.addr %s27, 3
          %s239 = sadd.s32 %s229, %s238
          %s240 = smul.addr %s239, 64
          %s241 = scalar_lea.hbm %s0, %s240
          %s242 = smul.u32 4, %s232
          %s243 = sshll.u32 %s228, 4
          %s244 = int_to_ptr.vmem [resolvable:$true] %s243
          %s245 = sshll.u32 %s242, 4
          %249 = dma.hbm_to_vmem [thread:$0]  (%p237), %s241, %s245, %s244, %s225, 64, 64, 4
        $region32: #{tpu_custom_call.1} parent=27 // pred_fallthru
          _
        // Predicated region
        $region33: #{tpu_custom_call.1} parent=27 // pred_check
          %p250 = pneg %p86
        $region34: #{tpu_custom_call.1} parent=27 // pred_check_branch
          %252 = sbr.rel (%p250) target = $region36
        $region35: #{tpu_custom_call.1} parent=27 // pred_region
          %s253 = sand.u32 %s20, 1
          %s254 = scalar_lea.sflag [#allocation7], %s253
          %s255 = sand.u32 %s76, 1
          %s256 = smul.addr %s255, 4
          %s257 = scalar_lea.vmem [#allocation6], %s256
          %s258 = sadd.s32 %s28, 1
          %s259 = smul.u32 %s258, 2
          %s261 = ssub.s32 64, 64
          %262 = vsyncadd %s254, %s261
          %s263 = smul.addr %s27, 3
          %s264 = sadd.s32 %s259, %s263
          %s265 = smul.addr %s264, 64
          %s266 = scalar_lea.hbm %s1, %s265
          %s268 = sshll.u32 %s257, 4
          %s269 = int_to_ptr.vmem [resolvable:$true] %s268
          %271 = dma.hbm_to_vmem [thread:$0]  %s266, 64, %s269, %s254
        $region36: #{tpu_custom_call.1} parent=27 // pred_fallthru
          _
      $region28: #{tpu_custom_call.1} parent=5 // pred_fallthru
        _
      %p272 = scmp.le.s32.totalorder 1, %s20
      %p273 = scmp.lt.s32.totalorder %s20, 3
      %p274 = pnand %p272, %p273
      %p275 = pneg %p274
      // Predicated region
      $region37: #{tpu_custom_call.1} parent=5 // pred_check
        _
      $region38: #{tpu_custom_call.1} parent=5 // pred_check_branch
        %277 = sbr.rel (%p274) target = $region40
      $region39: #{tpu_custom_call.1} parent=5 // pred_region
        %s278 = ssub.s32 %s20, 1
        %s279 = sand.u32 %s47, 1
        %s280 = scalar_lea.sflag [#allocation4], %s279
        %s281 = sand.u32 %s47, 1
        %s282 = smul.addr %s281, 8
        %s283 = scalar_lea.vmem [#allocation3], %s282
        // Predicated region
        $region41: #{tpu_custom_call.1} parent=39 // pred_check
          %p284 = pneg %p60
        $region42: #{tpu_custom_call.1} parent=39 // pred_check_branch
          %286 = sbr.rel (%p284) target = $region44
        $region43: #{tpu_custom_call.1} parent=39 // pred_region
          %287 = dma.done %s280, 128
        $region44: #{tpu_custom_call.1} parent=39 // pred_fallthru
          _
        %s288 = sand.u32 %s25, 1
        %s289 = scalar_lea.sflag [#allocation7], %s288
        %s290 = sand.u32 %s79, 1
        %s291 = smul.addr %s290, 4
        %s292 = scalar_lea.vmem [#allocation6], %s291
        // Predicated region
        $region45: #{tpu_custom_call.1} parent=39 // pred_check
          %p293 = pneg %p92
        $region46: #{tpu_custom_call.1} parent=39 // pred_check_branch
          %295 = sbr.rel (%p293) target = $region48
        $region47: #{tpu_custom_call.1} parent=39 // pred_region
          %296 = dma.done %s289, 64
        $region48: #{tpu_custom_call.1} parent=39 // pred_fallthru
          _
        // Predicated region
        $region49: #{tpu_custom_call.1} parent=39 // pred_check
          %p297 = pneg %p134
        $region50: #{tpu_custom_call.1} parent=39 // pred_check_branch
          %299 = sbr.rel (%p297) target = $region52
        $region51: #{tpu_custom_call.1} parent=39 // pred_region
          %300 = dma.done [#allocation7], 1024
        $region52: #{tpu_custom_call.1} parent=39 // pred_fallthru
          _
        %s301 = sand.u32 %s47, 1
        %s302 = scalar_lea.sflag [#allocation4], %s301
        %s303 = sand.u32 %s47, 1
        %s304 = smul.addr %s303, 8
        %s305 = scalar_lea.vmem [#allocation3], %s304
        %p306 = pneg %p60
        %p307 = pneg %p57
        %s308 = sand.u32 %s25, 1
        %s309 = scalar_lea.sflag [#allocation7], %s308
        %s310 = sand.u32 %s79, 1
        %s311 = smul.addr %s310, 4
        %s312 = scalar_lea.vmem [#allocation6], %s311
        %p313 = pneg %p92
        %p314 = pneg %p89
        %p315 = pneg %p113
        %p316 = pneg %p110
        %p317 = pneg %p134
        %p318 = pneg %p131
        %p319 = pneg %p155
        %p320 = pneg %p152
        %p321 = pneg %p183
        %p322 = pneg %p180
        %s323 = sand.u32 %s170, 1
        %s324 = scalar_lea.sflag [#allocation5], %s323
        %s325 = sand.u32 %s170, 1
        %s326 = smul.addr %s325, 8
        %s327 = scalar_lea.vmem [#allocation9], %s326
        %s328 = smul.u32 2, %s30
        %s329 = ssub.s32 3, %s328
        %p330 = scmp.lt.s32.totalorder %s329, 2
        %s331 = scalar_select %p330, %s329, 2
        %s332 = smul.u32 64, %s331
        %s333 = sadd.s32 %s30, 1
        %s334 = smul.u32 %s333, 2
        %s335 = smul.u32 2, %s30
        %v337 = vld [vmem:[%s283] sm:$0xf]
        %v338 = vld [vmem:[%s283 + $0x4] sm:$0xf]
        %v339 = vunpack.c.l.bf16 %v337
        %v340 = vunpack.c.l.bf16 %v338
        %341 = vst [vmem:[#allocation2] sm:$0xff] %v339
        %342 = vst [vmem:[#allocation2 + $0x8] sm:$0xff] %v340
        %v343 = vld [vmem:[%s292] sm:$0xf]
        %v344 = vunpack.c.l.bf16 %v343
        %345 = vst [vmem:[#allocation2 + $0x10] sm:$0xff] %v344
        %v346 = vld [vmem:[%s4] sm:$0x1]
        %v347 = vld [vmem:[#allocation8] sm:$0xf]
        %v348 = vld [vmem:[#allocation8 + $0x4] sm:$0xf]
        %v349 = vld [vmem:[#allocation8 + $0x8] sm:$0xf]
        %v350 = vld [vmem:[#allocation8 + $0xc] sm:$0xf]
        %v351 = vld [vmem:[#allocation8 + $0x10] sm:$0xf]
        %v352 = vld [vmem:[#allocation8 + $0x14] sm:$0xf]
        %v353 = vld [vmem:[#allocation8 + $0x18] sm:$0xf]
        %v354 = vld [vmem:[#allocation8 + $0x1c] sm:$0xf]
        %v355 = vld [vmem:[#allocation8 + $0x20] sm:$0xf]
        %v356 = vld [vmem:[#allocation8 + $0x24] sm:$0xf]
        %v357 = vld [vmem:[#allocation8 + $0x28] sm:$0xf]
        %v358 = vld [vmem:[#allocation8 + $0x2c] sm:$0xf]
        %v359 = vld [vmem:[#allocation8 + $0x30] sm:$0xf]
        %v360 = vld [vmem:[#allocation8 + $0x34] sm:$0xf]
        %v361 = vld [vmem:[#allocation8 + $0x38] sm:$0xf]
        %v362 = vld [vmem:[#allocation8 + $0x3c] sm:$0xf]
        %v363 = vld [vmem:[#allocation2] sm:$0xff]
        %v364 = vld [vmem:[#allocation2 + $0x8] sm:$0xff]
        %v365 = vld [vmem:[%s2] sm:$0x1]
        %v366 = vlaneseq
        %v367 = vshrl.u32 %v366, 7
        %v368 = vsub.s32 0, %v367
        %v369 = vrot.slane %v365, %v368
        %v370 = vmul.f32 %v363, %v369
        %v371 = vmul.f32 %v364, %v369
        %v372 = vld [vmem:[#allocation2 + $0x1] sm:$0xff]
        %v373 = vld [vmem:[#allocation2 + $0x9] sm:$0xff]
        %v374 = vld [vmem:[%s2 + $0x1] sm:$0x1]
        %v375 = vlaneseq
        %v376 = vshrl.u32 %v375, 7
        %v377 = vsub.s32 0, %v376
        %v378 = vrot.slane %v374, %v377
        %v379 = vmul.f32 %v372, %v378
        %v380 = vmul.f32 %v373, %v378
        %v381 = vadd.f32 %v370, %v379
        %v382 = vadd.f32 %v371, %v380
        %v383 = vld [vmem:[#allocation2 + $0x2] sm:$0xff]
        %v384 = vld [vmem:[#allocation2 + $0xa] sm:$0xff]
        %v385 = vld [vmem:[%s2 + $0x2] sm:$0x1]
        %v386 = vlaneseq
        %v387 = vshrl.u32 %v386, 7
        %v388 = vsub.s32 0, %v387
        %v389 = vrot.slane %v385, %v388
        %v390 = vmul.f32 %v383, %v389
        %v391 = vmul.f32 %v384, %v389
        %v392 = vadd.f32 %v381, %v390
        %v393 = vadd.f32 %v382, %v391
        %v394 = vpack.c.bf16 %v393, %v392
        %v396 = vlaneseq
        %v397 = vshrl.u32 %v396, 7
        %v398 = vsub.s32 0, %v397
        %v399 = vrot.slane %v346, %v398
        %v417 = vunpack.c.l.b16 %v347
        %v418 = vunpack.c.l.b16 %v348
        %v419 = vunpack.c.l.b16 %v349
        %v420 = vunpack.c.l.b16 %v350
        %v421 = vunpack.c.l.b16 %v351
        %v422 = vunpack.c.l.b16 %v352
        %v423 = vunpack.c.l.b16 %v353
        %v424 = vunpack.c.l.b16 %v354
        %v425 = vunpack.c.l.b16 %v355
        %v426 = vunpack.c.l.b16 %v356
        %v427 = vunpack.c.l.b16 %v357
        %v428 = vunpack.c.l.b16 %v358
        %v429 = vunpack.c.l.b16 %v359
        %v430 = vunpack.c.l.b16 %v360
        %v431 = vunpack.c.l.b16 %v361
        %v432 = vunpack.c.l.b16 %v362
        %v433 = vpack.c.b16 %v418, %v417
        %v434 = vpack.c.b16 %v420, %v419
        %v435 = vpack.c.b16 %v422, %v421
        %v436 = vpack.c.b16 %v424, %v423
        %v437 = vpack.c.b16 %v426, %v425
        %v438 = vpack.c.b16 %v428, %v427
        %v439 = vpack.c.b16 %v430, %v429
        %v440 = vpack.c.b16 %v432, %v431
        %449 = vmatprep.subr.bf16.mxu0 0
        %450 = vmatpush1.bf16.msra.mxu0 %v433
        %451 = vmatprep.subr.bf16.mxu0 0
        %452 = vmatpush1.bf16.msra.mxu0 %v434
        %453 = vmatprep.subr.bf16.mxu0 0
        %454 = vmatpush1.bf16.msra.mxu0 %v435
        %455 = vmatprep.subr.bf16.mxu0 0
        %456 = vmatpush1.bf16.msra.mxu0 %v436
        %457 = vmatprep.subr.bf16.mxu0 0
        %458 = vmatpush1.bf16.msra.mxu0 %v437
        %459 = vmatprep.subr.bf16.mxu0 0
        %460 = vmatpush1.bf16.msra.mxu0 %v438
        %461 = vmatprep.subr.bf16.mxu0 0
        %462 = vmatpush1.bf16.msra.mxu0 %v439
        %463 = vmatprep.subr.bf16.mxu0 0
        %464 = vmatpush1.bf16.msra.mxu0 %v440
        %465 = vmatprep.subr.bf16.mxu0 0
        %466 = vmatpush1.bf16.msra.mxu0 0
        %467 = vmatprep.subr.bf16.mxu0 0
        %468 = vmatpush1.bf16.msra.mxu0 0
        %469 = vmatprep.subr.bf16.mxu0 0
        %470 = vmatpush1.bf16.msra.mxu0 0
        %471 = vmatprep.subr.bf16.mxu0 0
        %472 = vmatpush1.bf16.msra.mxu0 0
        %473 = vmatprep.subr.bf16.mxu0 0
        %474 = vmatpush1.bf16.msra.mxu0 0
        %475 = vmatprep.subr.bf16.mxu0 0
        %476 = vmatpush1.bf16.msra.mxu0 0
        %477 = vmatprep.subr.bf16.mxu0 0
        %478 = vmatpush1.bf16.msra.mxu0 0
        %479 = vmatprep.subr.bf16.mxu0 0
        %480 = vmatpush1.bf16.msra.mxu0 0
        %481 = vmatprep.mubr.bf16.mxu0 0
        %482 = vmatmul.mubr.bf16.gmra.mrb[0].mxu0 %v394
        %v483 = vpop.f32.mrb[0].mxu0
        %v484 = vadd.f32 %v399, %v483
        %v485 = vpop.f32.mrb[0].mxu0
        %v486 = vpop.f32.mrb[0].mxu0
        %v487 = vadd.f32 %v399, %v486
        %v488 = vpop.f32.mrb[0].mxu0
        %489 = vdwg.mxu0
        %v490 = vmax.f32 %v484, 0.0
        %v491 = vmax.f32 %v487, 0.0
        %v492 = vpack.c.bf16 %v491, %v490
        %v494 = vunpack.c.l.b16 %v492
        %v495 = vunpack.c.h.b16 %v492
        %v496 = vpack.c.b16 %v494, %v494
        %v497 = vpack.c.b16 %v495, %v495
        %500 = vst [vmem:[%s327] sm:$0xf] %v496
        %501 = vst [vmem:[%s327 + $0x4] sm:$0xf] %v497
        %s502 = sand.u32 %s170, 1
        %s503 = scalar_lea.sflag [#allocation5], %s502
        %s504 = sand.u32 %s170, 1
        %s505 = smul.addr %s504, 8
        %s506 = scalar_lea.vmem [#allocation9], %s505
        // Predicated region
        $region53: #{tpu_custom_call.1} parent=39 // pred_check
          %p507 = pneg %p180
        $region54: #{tpu_custom_call.1} parent=39 // pred_check_branch
          %509 = sbr.rel (%p507) target = $region56
        $region55: #{tpu_custom_call.1} parent=39 // pred_region
          %s510 = smul.u32 2, %s30
          %s512 = ssub.s32 128, 128
          %513 = vsyncadd %s503, %s512
          %s514 = smul.addr %s29, 2
          %s515 = sadd.s32 %s510, %s514
          %s516 = smul.addr %s515, 64
          %s517 = scalar_lea.hbm %s5, %s516
          %s518 = sshll.u32 %s506, 4
          %s519 = int_to_ptr.vmem [resolvable:$true] %s518
          %524 = dma.vmem_to_hbm [thread:$0]  %s519, 128, %s517, %s503, 64, 64, 4
        $region56: #{tpu_custom_call.1} parent=39 // pred_fallthru
          _
      $region40: #{tpu_custom_call.1} parent=5 // pred_fallthru
        _
      %p525 = scmp.le.s32.totalorder 2, %s20
      // Predicated region
      $region57: #{tpu_custom_call.1} parent=5 // pred_check
        %p526 = pneg %p525
      $region58: #{tpu_custom_call.1} parent=5 // pred_check_branch
        %528 = sbr.rel (%p526) target = $region60
      $region59: #{tpu_custom_call.1} parent=5 // pred_region
        %s529 = ssub.s32 %s20, 2
        // Predicated region
        $region61: #{tpu_custom_call.1} parent=59 // pred_check
          %p530 = pneg %p186
        $region62: #{tpu_custom_call.1} parent=59 // pred_check_branch
          %532 = sbr.rel (%p530) target = $region64
        $region63: #{tpu_custom_call.1} parent=59 // pred_region
          %s533 = sand.u32 %s171, 1
          %s534 = scalar_lea.sflag [#allocation5], %s533
          %s535 = sand.u32 %s171, 1
          %s536 = smul.addr %s535, 8
          %s537 = scalar_lea.vmem [#allocation9], %s536
          %538 = dma.done %s534, 128
        $region64: #{tpu_custom_call.1} parent=59 // pred_fallthru
          _
      $region60: #{tpu_custom_call.1} parent=5 // pred_fallthru
        _
    $region6: #{tpu_custom_call.1} parent=1 // loop_footer
      %s24 = sadd.s32 1, %s20
    $region7: #{tpu_custom_call.1} parent=1 // loop_footer_branch
      %19 = sbr.rel target = $region3
    $region8: #{tpu_custom_call.1} parent=1 // loop_exit
      _
    %539 = vsyncpa [#allocation4], 1
    %s540 = scalar_lea.sflag [#allocation4], 1
    %541 = vsyncpa %s540, 1
    %542 = vsyncpa [#allocation7], 1
    %s543 = scalar_lea.sflag [#allocation7], 1
    %544 = vsyncpa %s543, 1
    %545 = vsyncpa [#allocation5], 1
    %s546 = scalar_lea.sflag [#allocation5], 1
    %547 = vsyncpa %s546, 1

</llo_original>
